<compile_context>
chip_gen: v7x
topology: tpu7x:2x2x1
jax: 0.10.0
libtpu: 0.0.40
codegen_flags: <defaults>
</compile_context>

<pallas_src>
import jax
import jax.numpy as jnp
from jax.experimental import pallas as pl
from jax.experimental.pallas import tpu as pltpu


def _round_up(x, m):
    return ((x + m - 1) // m) * m


def _choose_block_b(B):
    # VMEM cap: 4 double-buffered (TB, D<=128) f32 streams lane-pad to
    # TB*128*4 B each -> 4*2*TB*512 B = 16 MiB at TB=4096.
    tb_vmem = 4096
    # Keep >= 8 grid steps so megacore sharding / pipelining have work (v7x).
    tb_grid = _round_up(max(1, (B + 7) // 8), 8)
    tb = min(tb_vmem, tb_grid, _round_up(B, 8))
    return max(8, (tb // 8) * 8)


def gated_combination_kernel(x1_ref, x2_ref, x3_ref, x4_ref,
                             wat_ref, wbt_ref, ba_ref, bb_ref, d2_ref):
    # x{1..4}_ref: (TB, D) f32 activation tiles (streamed)
    # wat_ref/wbt_ref: (D, D) bf16 transposed gate weights (resident)
    # ba_ref/bb_ref:   (1, D) f32 gate biases            (resident)
    # d2_ref: (TB, 1) f32 squared L2 distance per row
    x1 = x1_ref[...]
    x2 = x2_ref[...]
    x3 = x3_ref[...]
    x4 = x4_ref[...]

    # Gate pre-activations: single-pass bf16 MXU matmuls, f32 accumulation.
    z1 = jnp.dot(x1.astype(jnp.bfloat16), wat_ref[...],
                 preferred_element_type=jnp.float32) + ba_ref[...]
    z2 = jnp.dot(x3.astype(jnp.bfloat16), wbt_ref[...],
                 preferred_element_type=jnp.float32) + bb_ref[...]
    g1 = jax.nn.sigmoid(z1)
    g2 = jax.nn.sigmoid(z2)

    # a - b with a = x2 + g1*(x1 - x2), b = x4 + g2*(x3 - x4)
    diff = (x2 - x4) + g1 * (x1 - x2) - g2 * (x3 - x4)
    sq = diff * diff

    # Per-row reduction on the MXU (keeps the XLU free); f32 for accuracy.
    ones = jnp.ones((sq.shape[1], 1), jnp.float32)
    d2_ref[...] = jnp.dot(sq, ones, preferred_element_type=jnp.float32)


def gated_combination(x1, x2, x3, x4, wa, ba, wb, bb, fc_w, fc_b, *, block_b=None):
    B, D = x1.shape

    # Tiny resident operands: transposed gate weights (bf16, single MXU pass)
    # and biases.
    wat = jnp.asarray(wa, jnp.float32).T.astype(jnp.bfloat16)
    wbt = jnp.asarray(wb, jnp.float32).T.astype(jnp.bfloat16)
    ba2 = jnp.asarray(ba, jnp.float32).reshape(1, D)
    bb2 = jnp.asarray(bb, jnp.float32).reshape(1, D)

    tb = block_b if block_b is not None else _choose_block_b(B)
    tb = max(8, (tb // 8) * 8)
    grid = (pl.cdiv(B, tb),)   # ragged last tile handled by Pallas masking

    d2 = pl.pallas_call(
        gated_combination_kernel,
        out_shape=jax.ShapeDtypeStruct((B, 1), jnp.float32),
        grid_spec=pltpu.PrefetchScalarGridSpec(
            num_scalar_prefetch=0,
            grid=grid,
            in_specs=[
                pl.BlockSpec((tb, D), lambda i: (i, 0)),   # x1
                pl.BlockSpec((tb, D), lambda i: (i, 0)),   # x2
                pl.BlockSpec((tb, D), lambda i: (i, 0)),   # x3
                pl.BlockSpec((tb, D), lambda i: (i, 0)),   # x4
                pl.BlockSpec((D, D), lambda i: (0, 0)),    # W_A^T (resident)
                pl.BlockSpec((D, D), lambda i: (0, 0)),    # W_B^T (resident)
                pl.BlockSpec((1, D), lambda i: (0, 0)),    # b_A   (resident)
                pl.BlockSpec((1, D), lambda i: (0, 0)),    # b_B   (resident)
            ],
            out_specs=pl.BlockSpec((tb, 1), lambda i: (i, 0)),
        ),
        compiler_params=pltpu.CompilerParams(
            dimension_semantics=("parallel",),
            vmem_limit_bytes=40 * 1024 * 1024,
        ),
    )(x1, x2, x3, x4, wat, wbt, ba2, bb2)

    # Scalar tail on the tiny (B, 1) result (cheap XLA elementwise).
    dist = jnp.sqrt(d2)
    return jax.nn.sigmoid(dist * fc_w + fc_b)


def init_linear(key, in_dim, out_dim):
    # nn.Linear default init: U(-1/sqrt(in), 1/sqrt(in)).
    kw, kb = jax.random.split(key)
    bound = 1.0 / jnp.sqrt(in_dim)
    w = jax.random.uniform(kw, (out_dim, in_dim), jnp.float32, -bound, bound)
    b = jax.random.uniform(kb, (out_dim,), jnp.float32, -bound, bound)
    return w, b


def reference(x1, x2, x3, x4, wa, ba, wb, bb, fcw, fcb):
    g1 = jax.nn.sigmoid(x1 @ wa.T + ba)
    a = x1 * g1 + x2 * (1.0 - g1)
    g2 = jax.nn.sigmoid(x3 @ wb.T + bb)
    b = x3 * g2 + x4 * (1.0 - g2)
    dist = jnp.linalg.norm(a - b, axis=1, keepdims=True)
    return jax.nn.sigmoid(dist * fcw + fcb)


def _run_case(key, B, D, block_b=None):
    k1, k2, k3, k4, kA, kB, kF = jax.random.split(key, 7)
    x1 = jax.random.normal(k1, (B, D), jnp.float32)
    x2 = jax.random.normal(k2, (B, D), jnp.float32)
    x3 = jax.random.normal(k3, (B, D), jnp.float32)
    x4 = jax.random.normal(k4, (B, D), jnp.float32)

    wa, ba = init_linear(kA, D, D)   # gate_A_fc: Linear(D, D)
    wb, bb = init_linear(kB, D, D)   # gate_B_fc: Linear(D, D)
    wf, bf = init_linear(kF, 1, 1)   # fc: Linear(1, 1)

    out = gated_combination(x1, x2, x3, x4, wa, ba, wb, bb,
                            wf[0, 0], bf[0], block_b=block_b)
    out = jax.block_until_ready(out)

    ref = reference(x1, x2, x3, x4, wa, ba, wb, bb, wf[0, 0], bf[0])
    assert out.shape == (B, 1)
    # bf16 gate matmul (f32 accumulate) -> tolerance loosened vs f32 reference.
    assert jnp.allclose(out, ref, atol=1e-2, rtol=1e-2)


if __name__ == "__main__":
    key = jax.random.PRNGKey(0)
    k_a, k_b = jax.random.split(key)

    # Small base case (single grid step).
    _run_case(k_a, B=8, D=32)

    # Multi-step grid + ragged last tile (B not a multiple of the block).
    _run_case(k_b, B=40, D=32, block_b=16)

    print("KERNEL_OK")
</pallas_src>

<mosaic_0001>
module attributes {stable_mosaic.version = 11 : i64} {
  func.func @gated_combination_kernel(%arg0: i32, %arg1: memref<8x32xf32, #tpu.memory_space<vmem>>, %arg2: memref<8x32xf32, #tpu.memory_space<vmem>>, %arg3: memref<8x32xf32, #tpu.memory_space<vmem>>, %arg4: memref<8x32xf32, #tpu.memory_space<vmem>>, %arg5: memref<32x32xbf16, #tpu.memory_space<vmem>>, %arg6: memref<32x32xbf16, #tpu.memory_space<vmem>>, %arg7: memref<1x32xf32, #tpu.memory_space<vmem>>, %arg8: memref<1x32xf32, #tpu.memory_space<vmem>>, %arg9: memref<8x1xf32, #tpu.memory_space<vmem>>) attributes {dimension_semantics = [#tpu.dimension_semantics<parallel>], iteration_bounds = array<i64: 1>, scalar_prefetch = 0 : i64, scratch_operands = 0 : i64, tpu.core_type = #tpu.core_type<tc>, window_params = [{transform_indices = @transform_0, window_bounds = array<i64: 8, 32>}, {transform_indices = @transform_1, window_bounds = array<i64: 8, 32>}, {transform_indices = @transform_2, window_bounds = array<i64: 8, 32>}, {transform_indices = @transform_3, window_bounds = array<i64: 8, 32>}, {pipeline_mode = #tpu.pipeline_mode<synchronous>, transform_indices = @transform_4, window_bounds = array<i64: 32, 32>}, {pipeline_mode = #tpu.pipeline_mode<synchronous>, transform_indices = @transform_5, window_bounds = array<i64: 32, 32>}, {pipeline_mode = #tpu.pipeline_mode<synchronous>, transform_indices = @transform_6, window_bounds = array<i64: 1, 32>}, {pipeline_mode = #tpu.pipeline_mode<synchronous>, transform_indices = @transform_7, window_bounds = array<i64: 1, 32>}, {transform_indices = @transform_8, window_bounds = array<i64: 8, 1>}]} {
    %c0 = arith.constant 0 : index
    %c0_0 = arith.constant 0 : index
    %0 = vector.load %arg1[%c0, %c0_0] : memref<8x32xf32, #tpu.memory_space<vmem>>, vector<8x32xf32>
    %c0_1 = arith.constant 0 : index
    %c0_2 = arith.constant 0 : index
    %1 = vector.load %arg2[%c0_1, %c0_2] : memref<8x32xf32, #tpu.memory_space<vmem>>, vector<8x32xf32>
    %c0_3 = arith.constant 0 : index
    %c0_4 = arith.constant 0 : index
    %2 = vector.load %arg3[%c0_3, %c0_4] : memref<8x32xf32, #tpu.memory_space<vmem>>, vector<8x32xf32>
    %c0_5 = arith.constant 0 : index
    %c0_6 = arith.constant 0 : index
    %3 = vector.load %arg4[%c0_5, %c0_6] : memref<8x32xf32, #tpu.memory_space<vmem>>, vector<8x32xf32>
    %4 = arith.truncf %0 : vector<8x32xf32> to vector<8x32xbf16>
    %c0_7 = arith.constant 0 : index
    %c0_8 = arith.constant 0 : index
    %5 = vector.load %arg5[%c0_7, %c0_8] : memref<32x32xbf16, #tpu.memory_space<vmem>>, vector<32x32xbf16>
    %cst = arith.constant dense<0.000000e+00> : vector<8x32xf32>
    %6 = tpu.matmul %4, %5, %cst {dimension_numbers = #tpu.dot_dimension_numbers<[1], [0], [0], [1], [0, 0, 1, 1], [], []>} : vector<8x32xbf16>, vector<32x32xbf16>, vector<8x32xf32> -> vector<8x32xf32>
    %c0_9 = arith.constant 0 : index
    %c0_10 = arith.constant 0 : index
    %7 = vector.load %arg7[%c0_9, %c0_10] : memref<1x32xf32, #tpu.memory_space<vmem>>, vector<1x32xf32>
    %8 = vector.broadcast %7 : vector<1x32xf32> to vector<8x32xf32>
    %9 = arith.addf %6, %8 : vector<8x32xf32>
    %10 = arith.truncf %2 : vector<8x32xf32> to vector<8x32xbf16>
    %c0_11 = arith.constant 0 : index
    %c0_12 = arith.constant 0 : index
    %11 = vector.load %arg6[%c0_11, %c0_12] : memref<32x32xbf16, #tpu.memory_space<vmem>>, vector<32x32xbf16>
    %cst_13 = arith.constant dense<0.000000e+00> : vector<8x32xf32>
    %12 = tpu.matmul %10, %11, %cst_13 {dimension_numbers = #tpu.dot_dimension_numbers<[1], [0], [0], [1], [0, 0, 1, 1], [], []>} : vector<8x32xbf16>, vector<32x32xbf16>, vector<8x32xf32> -> vector<8x32xf32>
    %c0_14 = arith.constant 0 : index
    %c0_15 = arith.constant 0 : index
    %13 = vector.load %arg8[%c0_14, %c0_15] : memref<1x32xf32, #tpu.memory_space<vmem>>, vector<1x32xf32>
    %14 = vector.broadcast %13 : vector<1x32xf32> to vector<8x32xf32>
    %15 = arith.addf %12, %14 : vector<8x32xf32>
    %16 = arith.negf %9 : vector<8x32xf32>
    %17 = math.exp %16 : vector<8x32xf32>
    %cst_16 = arith.constant 1.000000e+00 : f32
    %18 = vector.broadcast %cst_16 : f32 to vector<8x32xf32>
    %19 = arith.addf %18, %17 : vector<8x32xf32>
    %20 = arith.divf %18, %19 : vector<8x32xf32>
    %21 = arith.negf %15 : vector<8x32xf32>
    %22 = math.exp %21 : vector<8x32xf32>
    %cst_17 = arith.constant 1.000000e+00 : f32
    %23 = vector.broadcast %cst_17 : f32 to vector<8x32xf32>
    %24 = arith.addf %23, %22 : vector<8x32xf32>
    %25 = arith.divf %23, %24 : vector<8x32xf32>
    %26 = arith.subf %1, %3 : vector<8x32xf32>
    %27 = arith.subf %0, %1 : vector<8x32xf32>
    %28 = arith.mulf %20, %27 : vector<8x32xf32>
    %29 = arith.addf %26, %28 : vector<8x32xf32>
    %30 = arith.subf %2, %3 : vector<8x32xf32>
    %31 = arith.mulf %25, %30 : vector<8x32xf32>
    %32 = arith.subf %29, %31 : vector<8x32xf32>
    %33 = arith.mulf %32, %32 : vector<8x32xf32>
    %cst_18 = arith.constant 1.000000e+00 : f32
    %34 = vector.broadcast %cst_18 : f32 to vector<32x1xf32>
    %cst_19 = arith.constant dense<0.000000e+00> : vector<8x1xf32>
    %35 = tpu.matmul %33, %34, %cst_19 {dimension_numbers = #tpu.dot_dimension_numbers<[1], [0], [0], [1], [0, 0, 1, 1], [], []>} : vector<8x32xf32>, vector<32x1xf32>, vector<8x1xf32> -> vector<8x1xf32>
    %c0_20 = arith.constant 0 : index
    %c0_21 = arith.constant 0 : index
    %36 = vector.load %arg9[%c0_20, %c0_21] : memref<8x1xf32, #tpu.memory_space<vmem>>, vector<8x1xf32>
    tpu.vector_store %arg9[%c0_20, %c0_21], %35 {strides = array<i32>} : memref<8x1xf32, #tpu.memory_space<vmem>>, vector<8x1xf32>,
    return
  }
  func.func @transform_0(%arg0: i32) -> (i32, i32) {
    %c0_i32 = arith.constant 0 : i32
    %c0_i32_0 = arith.constant 0 : i32
    return %arg0, %c0_i32 : i32, i32
  }
  func.func @transform_1(%arg0: i32) -> (i32, i32) {
    %c0_i32 = arith.constant 0 : i32
    %c0_i32_0 = arith.constant 0 : i32
    return %arg0, %c0_i32 : i32, i32
  }
  func.func @transform_2(%arg0: i32) -> (i32, i32) {
    %c0_i32 = arith.constant 0 : i32
    %c0_i32_0 = arith.constant 0 : i32
    return %arg0, %c0_i32 : i32, i32
  }
  func.func @transform_3(%arg0: i32) -> (i32, i32) {
    %c0_i32 = arith.constant 0 : i32
    %c0_i32_0 = arith.constant 0 : i32
    return %arg0, %c0_i32 : i32, i32
  }
  func.func @transform_4(%arg0: i32) -> (i32, i32) {
    %c0_i32 = arith.constant 0 : i32
    %c0_i32_0 = arith.constant 0 : i32
    %c0_i32_1 = arith.constant 0 : i32
    return %c0_i32, %c0_i32_0 : i32, i32
  }
  func.func @transform_5(%arg0: i32) -> (i32, i32) {
    %c0_i32 = arith.constant 0 : i32
    %c0_i32_0 = arith.constant 0 : i32
    %c0_i32_1 = arith.constant 0 : i32
    return %c0_i32, %c0_i32_0 : i32, i32
  }
  func.func @transform_6(%arg0: i32) -> (i32, i32) {
    %c0_i32 = arith.constant 0 : i32
    %c0_i32_0 = arith.constant 0 : i32
    %c0_i32_1 = arith.constant 0 : i32
    return %c0_i32, %c0_i32_0 : i32, i32
  }
  func.func @transform_7(%arg0: i32) -> (i32, i32) {
    %c0_i32 = arith.constant 0 : i32
    %c0_i32_0 = arith.constant 0 : i32
    %c0_i32_1 = arith.constant 0 : i32
    return %c0_i32, %c0_i32_0 : i32, i32
  }
  func.func @transform_8(%arg0: i32) -> (i32, i32) {
    %c0_i32 = arith.constant 0 : i32
    %c0_i32_0 = arith.constant 0 : i32
    return %arg0, %c0_i32 : i32, i32
  }
}

</mosaic_0001>

<llo_original>
// kernel: tpu_custom_call.1
$region0: #{tpu_custom_call.1}
  #allocation0 [shape = 'u32[]', space=smem, size = 0x4, offset = 0x4, fixed_abs, tag = 'smem constant byte address 0x4 - core index']
  #allocation1 [shape = 'u32[144,128]{1,0:T(1,128)}', space=vmem, size = 0x12000, scoped, tag = 'internal scratch']
  %s0 = inlined_call_operand.hbm [shape: f32[8,32], index: 0, kind: input, shape index: {}]
  %s1 = inlined_call_operand.hbm [shape: f32[8,32], index: 1, kind: input, shape index: {}]
  %s2 = inlined_call_operand.hbm [shape: f32[8,32], index: 2, kind: input, shape index: {}]
  %s3 = inlined_call_operand.hbm [shape: f32[8,32], index: 3, kind: input, shape index: {}]
  %s4 = inlined_call_operand.hbm [shape: bf16[32,32], index: 4, kind: input, shape index: {}]
  %s5 = inlined_call_operand.vmem [shape: bf16[32,32], index: 5, kind: input, shape index: {}]
  %s6 = inlined_call_operand.vmem [shape: f32[1,32], index: 6, kind: input, shape index: {}]
  %s7 = inlined_call_operand.vmem [shape: f32[1,32], index: 7, kind: input, shape index: {}]
  %s8 = inlined_call_operand.vmem [shape: f32[8,1], index: 8, kind: output, shape index: {}]
  %s9 = sld [smem:[#allocation0]]
  $region62: #{tpu_custom_call.1} parent=0
    _
  %s11 = ssub.s32 1, %s9
  %s12 = scalar_select 0, %s11, %s9
  $region1: #{tpu_custom_call.1} parent=0
    #allocation2 [shape = 'u8[4096]{0}', space=vmem, size = 0x1000, scoped, tag = 'input window, operand 0, single buffered']
    #allocation3 [shape = 's32[1]{0}', space=sflag, size = 0x4, scoped, tag = 'scoped memory for tpu_custom_call.1']
    #allocation4 [shape = 'u8[4096]{0}', space=vmem, size = 0x1000, scoped, tag = 'input window, operand 1, single buffered']
    #allocation5 [shape = 's32[1]{0}', space=sflag, size = 0x4, scoped, tag = 'scoped memory for tpu_custom_call.1']
    #allocation6 [shape = 'u8[4096]{0}', space=vmem, size = 0x1000, scoped, tag = 'input window, operand 2, single buffered']
    #allocation7 [shape = 'u8[4096]{0}', space=vmem, size = 0x1000, scoped, tag = 'input window, operand 3, single buffered']
    #allocation8 [shape = 's32[1]{0}', space=sflag, size = 0x4, scoped, tag = 'scoped memory for tpu_custom_call.1']
    #allocation9 [shape = 'u8[8192]{0}', space=vmem, size = 0x2000, scoped, tag = 'input window, operand 4, single buffered']
    %13 = vsyncpa [#allocation3], 0
    %14 = vsyncpa [#allocation5], 0
    %15 = vsyncpa [#allocation8], 0
    // Predicated region
    $region2: #{tpu_custom_call.1} parent=1 // pred_check
      _
    $region3: #{tpu_custom_call.1} parent=1 // pred_check_branch
      %17 = sbr.rel (0) target = $region5
    $region4: #{tpu_custom_call.1} parent=1 // pred_region
      %s19 = ssub.s32 128, 128
      %20 = vsyncadd [#allocation3], %s19
      %s22 = sshll.u32 [#allocation2], 4
      %s23 = int_to_ptr.vmem [resolvable:$true] %s22
      %25 = dma.hbm_to_vmem [thread:$0]  %s0, 128, %s23, [#allocation3]
    $region5: #{tpu_custom_call.1} parent=1 // pred_fallthru
      _
    // Predicated region
    $region6: #{tpu_custom_call.1} parent=1 // pred_check
      _
    $region7: #{tpu_custom_call.1} parent=1 // pred_check_branch
      %27 = sbr.rel (0) target = $region9
    $region8: #{tpu_custom_call.1} parent=1 // pred_region
      %s29 = ssub.s32 128, 128
      %30 = vsyncadd [#allocation5], %s29
      %s32 = sshll.u32 [#allocation4], 4
      %s33 = int_to_ptr.vmem [resolvable:$true] %s32
      %35 = dma.hbm_to_vmem [thread:$0]  %s1, 128, %s33, [#allocation5]
    $region9: #{tpu_custom_call.1} parent=1 // pred_fallthru
      _
    // Predicated region
    $region10: #{tpu_custom_call.1} parent=1 // pred_check
      _
    $region11: #{tpu_custom_call.1} parent=1 // pred_check_branch
      %37 = sbr.rel (0) target = $region13
    $region12: #{tpu_custom_call.1} parent=1 // pred_region
      %s39 = ssub.s32 128, 128
      %40 = vsyncadd [#allocation5], %s39
      %s42 = sshll.u32 [#allocation6], 4
      %s43 = int_to_ptr.vmem [resolvable:$true] %s42
      %45 = dma.hbm_to_vmem [thread:$0]  %s2, 128, %s43, [#allocation5]
    $region13: #{tpu_custom_call.1} parent=1 // pred_fallthru
      _
    // Predicated region
    $region14: #{tpu_custom_call.1} parent=1 // pred_check
      _
    $region15: #{tpu_custom_call.1} parent=1 // pred_check_branch
      %47 = sbr.rel (0) target = $region17
    $region16: #{tpu_custom_call.1} parent=1 // pred_region
      %s49 = ssub.s32 128, 128
      %50 = vsyncadd [#allocation8], %s49
      %s52 = sshll.u32 [#allocation7], 4
      %s53 = int_to_ptr.vmem [resolvable:$true] %s52
      %55 = dma.hbm_to_vmem [thread:$0]  %s3, 128, %s53, [#allocation8]
    $region17: #{tpu_custom_call.1} parent=1 // pred_fallthru
      _
    // Predicated region
    $region18: #{tpu_custom_call.1} parent=1 // pred_check
      _
    $region19: #{tpu_custom_call.1} parent=1 // pred_check_branch
      %57 = sbr.rel (0) target = $region21
    $region20: #{tpu_custom_call.1} parent=1 // pred_region
      %s59 = ssub.s32 256, 256
      %60 = vsyncadd [#allocation8], %s59
      %s61 = sshll.u32 [#allocation9], 4
      %s62 = int_to_ptr.vmem [resolvable:$true] %s61
      %67 = dma.hbm_to_vmem [thread:$0]  %s4, 256, %s62, [#allocation8], 64, 64, 4
    $region21: #{tpu_custom_call.1} parent=1 // pred_fallthru
      _
    // Predicated region
    $region22: #{tpu_custom_call.1} parent=1 // pred_check
      _
    $region23: #{tpu_custom_call.1} parent=1 // pred_check_branch
      %69 = sbr.rel (0) target = $region25
    $region24: #{tpu_custom_call.1} parent=1 // pred_region
      _
    $region25: #{tpu_custom_call.1} parent=1 // pred_fallthru
      _
    // Predicated region
    $region26: #{tpu_custom_call.1} parent=1 // pred_check
      _
    $region27: #{tpu_custom_call.1} parent=1 // pred_check_branch
      %71 = sbr.rel (0) target = $region29
    $region28: #{tpu_custom_call.1} parent=1 // pred_region
      _
    $region29: #{tpu_custom_call.1} parent=1 // pred_fallthru
      _
    // Predicated region
    $region30: #{tpu_custom_call.1} parent=1 // pred_check
      _
    $region31: #{tpu_custom_call.1} parent=1 // pred_check_branch
      %73 = sbr.rel (0) target = $region33
    $region32: #{tpu_custom_call.1} parent=1 // pred_region
      _
    $region33: #{tpu_custom_call.1} parent=1 // pred_fallthru
      _
    // Predicated region
    $region34: #{tpu_custom_call.1} parent=1 // pred_check
      _
    $region35: #{tpu_custom_call.1} parent=1 // pred_check_branch
      %75 = sbr.rel (0) target = $region37
    $region36: #{tpu_custom_call.1} parent=1 // pred_region
      %76 = dma.done [#allocation3], 128
    $region37: #{tpu_custom_call.1} parent=1 // pred_fallthru
      _
    // Predicated region
    $region38: #{tpu_custom_call.1} parent=1 // pred_check
      _
    $region39: #{tpu_custom_call.1} parent=1 // pred_check_branch
      %78 = sbr.rel (0) target = $region41
    $region40: #{tpu_custom_call.1} parent=1 // pred_region
      %79 = dma.done [#allocation5], 128
    $region41: #{tpu_custom_call.1} parent=1 // pred_fallthru
      _
    // Predicated region
    $region42: #{tpu_custom_call.1} parent=1 // pred_check
      _
    $region43: #{tpu_custom_call.1} parent=1 // pred_check_branch
      %81 = sbr.rel (0) target = $region45
    $region44: #{tpu_custom_call.1} parent=1 // pred_region
      %82 = dma.done [#allocation5], 128
    $region45: #{tpu_custom_call.1} parent=1 // pred_fallthru
      _
    // Predicated region
    $region46: #{tpu_custom_call.1} parent=1 // pred_check
      _
    $region47: #{tpu_custom_call.1} parent=1 // pred_check_branch
      %84 = sbr.rel (0) target = $region49
    $region48: #{tpu_custom_call.1} parent=1 // pred_region
      %85 = dma.done [#allocation8], 128
    $region49: #{tpu_custom_call.1} parent=1 // pred_fallthru
      _
    // Predicated region
    $region50: #{tpu_custom_call.1} parent=1 // pred_check
      _
    $region51: #{tpu_custom_call.1} parent=1 // pred_check_branch
      %87 = sbr.rel (0) target = $region53
    $region52: #{tpu_custom_call.1} parent=1 // pred_region
      %88 = dma.done [#allocation8], 256
    $region53: #{tpu_custom_call.1} parent=1 // pred_fallthru
      _
    %v90 = vld [vmem:[#allocation2] sm:$0xff]
    %v91 = vld [vmem:[#allocation4] sm:$0xff]
    %v92 = vld [vmem:[#allocation6] sm:$0xff]
    %v93 = vld [vmem:[#allocation7] sm:$0xff]
    %v94 = vpack.c.bf16 %v90, %v90
    %v95 = vld [vmem:[#allocation9] sm:$0xf]
    %v96 = vld [vmem:[#allocation9 + $0x4] sm:$0xf]
    %v97 = vld [vmem:[#allocation9 + $0x8] sm:$0xf]
    %v98 = vld [vmem:[#allocation9 + $0xc] sm:$0xf]
    %v99 = vld [vmem:[%s6] sm:$0x1]
    %v101 = vlaneseq
    %v102 = vshrl.u32 %v101, 7
    %v103 = vsub.s32 0, %v102
    %v104 = vrot.slane %v99, %v103
    %v110 = vunpack.c.l.b16 %v95
    %v111 = vunpack.c.l.b16 %v96
    %v112 = vunpack.c.l.b16 %v97
    %v113 = vunpack.c.l.b16 %v98
    %v114 = vpack.c.b16 %v111, %v110
    %v115 = vpack.c.b16 %v113, %v112
    %vm118 = vcmask 261120
    %v120 = vsel %vm118, %v94, 0
    %122 = vmatprep.subr.bf16.mxu0 0
    %123 = vmatpush1.bf16.msra.mxu0 %v114
    %124 = vmatprep.subr.bf16.mxu0 0
    %125 = vmatpush1.bf16.msra.mxu0 %v115
    %126 = vmatprep.subr.bf16.mxu0 0
    %127 = vmatpush1.bf16.msra.mxu0 0
    %128 = vmatprep.subr.bf16.mxu0 0
    %129 = vmatpush1.bf16.msra.mxu0 0
    %130 = vmatprep.subr.bf16.mxu0 0
    %131 = vmatpush1.bf16.msra.mxu0 0
    %132 = vmatprep.subr.bf16.mxu0 0
    %133 = vmatpush1.bf16.msra.mxu0 0
    %134 = vmatprep.subr.bf16.mxu0 0
    %135 = vmatpush1.bf16.msra.mxu0 0
    %136 = vmatprep.subr.bf16.mxu0 0
    %137 = vmatpush1.bf16.msra.mxu0 0
    %138 = vmatprep.subr.bf16.mxu0 0
    %139 = vmatpush1.bf16.msra.mxu0 0
    %140 = vmatprep.subr.bf16.mxu0 0
    %141 = vmatpush1.bf16.msra.mxu0 0
    %142 = vmatprep.subr.bf16.mxu0 0
    %143 = vmatpush1.bf16.msra.mxu0 0
    %144 = vmatprep.subr.bf16.mxu0 0
    %145 = vmatpush1.bf16.msra.mxu0 0
    %146 = vmatprep.subr.bf16.mxu0 0
    %147 = vmatpush1.bf16.msra.mxu0 0
    %148 = vmatprep.subr.bf16.mxu0 0
    %149 = vmatpush1.bf16.msra.mxu0 0
    %150 = vmatprep.subr.bf16.mxu0 0
    %151 = vmatpush1.bf16.msra.mxu0 0
    %152 = vmatprep.subr.bf16.mxu0 0
    %153 = vmatpush1.bf16.msra.mxu0 0
    %154 = vmatprep.mubr.bf16.mxu0 0
    %155 = vmatmul.mubr.bf16.gmra.mrb[0].mxu0 %v120
    %v156 = vpop.f32.mrb[0].mxu0
    %v157 = vadd.f32 %v104, %v156
    %v158 = vpop.f32.mrb[0].mxu0
    %v159 = vpop.f32.mrb[0].mxu0
    %v160 = vpop.f32.mrb[0].mxu0
    %161 = vdwg.mxu0
    %v162 = vpack.c.bf16 %v92, %v92
    %v163 = vld [vmem:[%s5] sm:$0xf]
    %v164 = vld [vmem:[%s5 + $0x4] sm:$0xf]
    %v165 = vld [vmem:[%s5 + $0x8] sm:$0xf]
    %v166 = vld [vmem:[%s5 + $0xc] sm:$0xf]
    %v167 = vld [vmem:[%s7] sm:$0x1]
    %v169 = vlaneseq
    %v170 = vshrl.u32 %v169, 7
    %v171 = vsub.s32 0, %v170
    %v172 = vrot.slane %v167, %v171
    %v178 = vunpack.c.l.b16 %v163
    %v179 = vunpack.c.l.b16 %v164
    %v180 = vunpack.c.l.b16 %v165
    %v181 = vunpack.c.l.b16 %v166
    %v182 = vpack.c.b16 %v179, %v178
    %v183 = vpack.c.b16 %v181, %v180
    %v187 = vsel %vm118, %v162, 0
    %189 = vmatprep.subr.bf16.mxu0 0
    %190 = vmatpush1.bf16.msra.mxu0 %v182
    %191 = vmatprep.subr.bf16.mxu0 0
    %192 = vmatpush1.bf16.msra.mxu0 %v183
    %193 = vmatprep.subr.bf16.mxu0 0
    %194 = vmatpush1.bf16.msra.mxu0 0
    %195 = vmatprep.subr.bf16.mxu0 0
    %196 = vmatpush1.bf16.msra.mxu0 0
    %197 = vmatprep.subr.bf16.mxu0 0
    %198 = vmatpush1.bf16.msra.mxu0 0
    %199 = vmatprep.subr.bf16.mxu0 0
    %200 = vmatpush1.bf16.msra.mxu0 0
    %201 = vmatprep.subr.bf16.mxu0 0
    %202 = vmatpush1.bf16.msra.mxu0 0
    %203 = vmatprep.subr.bf16.mxu0 0
    %204 = vmatpush1.bf16.msra.mxu0 0
    %205 = vmatprep.subr.bf16.mxu0 0
    %206 = vmatpush1.bf16.msra.mxu0 0
    %207 = vmatprep.subr.bf16.mxu0 0
    %208 = vmatpush1.bf16.msra.mxu0 0
    %209 = vmatprep.subr.bf16.mxu0 0
    %210 = vmatpush1.bf16.msra.mxu0 0
    %211 = vmatprep.subr.bf16.mxu0 0
    %212 = vmatpush1.bf16.msra.mxu0 0
    %213 = vmatprep.subr.bf16.mxu0 0
    %214 = vmatpush1.bf16.msra.mxu0 0
    %215 = vmatprep.subr.bf16.mxu0 0
    %216 = vmatpush1.bf16.msra.mxu0 0
    %217 = vmatprep.subr.bf16.mxu0 0
    %218 = vmatpush1.bf16.msra.mxu0 0
    %219 = vmatprep.subr.bf16.mxu0 0
    %220 = vmatpush1.bf16.msra.mxu0 0
    %221 = vmatprep.mubr.bf16.mxu0 0
    %222 = vmatmul.mubr.bf16.gmra.mrb[0].mxu0 %v187
    %v223 = vpop.f32.mrb[0].mxu0
    %v224 = vadd.f32 %v172, %v223
    %v225 = vpop.f32.mrb[0].mxu0
    %v226 = vpop.f32.mrb[0].mxu0
    %v227 = vpop.f32.mrb[0].mxu0
    %228 = vdwg.mxu0
    %v229 = vxor.u32 %v157, 2147483648
    %v230 = vmul.f32 %v229, 1.442695
    %v231 = vpow.pop %v230
    %v232 = vadd.f32 %v231, 1.0
    %v233 = vrcp.pop %v232
    %v234 = vmul.f32 1.0, %v233
    %v235 = vxor.u32 %v224, 2147483648
    %v236 = vmul.f32 %v235, 1.442695
    %v237 = vpow.pop %v236
    %v238 = vadd.f32 %v237, 1.0
    %v239 = vrcp.pop %v238
    %v240 = vmul.f32 1.0, %v239
    %v241 = vsub.f32 %v91, %v93
    %v242 = vsub.f32 %v90, %v91
    %v243 = vmul.f32 %v234, %v242
    %v244 = vadd.f32 %v241, %v243
    %v245 = vsub.f32 %v92, %v93
    %v246 = vmul.f32 %v240, %v245
    %v247 = vsub.f32 %v244, %v246
    %v248 = vmul.f32 %v247, %v247
    %v250 = vsel %vm118, %v248, 0
    %252 = vmatprep.subr.mxu0 0.0
    %253 = vmatpush1.msra.mxu0 1.0
    %254 = vmatprep.subr.mxu0 0.0
    %255 = vmatpush1.msra.mxu0 1.0
    %256 = vmatprep.subr.mxu0 0.0
    %257 = vmatpush1.msra.mxu0 1.0
    %258 = vmatprep.subr.mxu0 0.0
    %259 = vmatpush1.msra.mxu0 1.0
    %260 = vmatprep.subr.mxu0 0.0
    %261 = vmatpush1.msra.mxu0 0.0
    %262 = vmatprep.subr.mxu0 0.0
    %263 = vmatpush1.msra.mxu0 0.0
    %264 = vmatprep.subr.mxu0 0.0
    %265 = vmatpush1.msra.mxu0 0.0
    %266 = vmatprep.subr.mxu0 0.0
    %267 = vmatpush1.msra.mxu0 0.0
    %268 = vmatprep.subr.mxu0 0.0
    %269 = vmatpush1.msra.mxu0 0.0
    %270 = vmatprep.subr.mxu0 0.0
    %271 = vmatpush1.msra.mxu0 0.0
    %272 = vmatprep.subr.mxu0 0.0
    %273 = vmatpush1.msra.mxu0 0.0
    %274 = vmatprep.subr.mxu0 0.0
    %275 = vmatpush1.msra.mxu0 0.0
    %276 = vmatprep.subr.mxu0 0.0
    %277 = vmatpush1.msra.mxu0 0.0
    %278 = vmatprep.subr.mxu0 0.0
    %279 = vmatpush1.msra.mxu0 0.0
    %280 = vmatprep.subr.mxu0 0.0
    %281 = vmatpush1.msra.mxu0 0.0
    %282 = vmatprep.subr.mxu0 0.0
    %283 = vmatpush1.msra.mxu0 0.0
    %284 = vmatprep.subr.mxu0 0.0
    %285 = vmatpush1.msra.mxu0 0.0
    %286 = vmatprep.subr.mxu0 0.0
    %287 = vmatpush1.msra.mxu0 0.0
    %288 = vmatprep.subr.mxu0 0.0
    %289 = vmatpush1.msra.mxu0 0.0
    %290 = vmatprep.subr.mxu0 0.0
    %291 = vmatpush1.msra.mxu0 0.0
    %292 = vmatprep.subr.mxu0 0.0
    %293 = vmatpush1.msra.mxu0 0.0
    %294 = vmatprep.subr.mxu0 0.0
    %295 = vmatpush1.msra.mxu0 0.0
    %296 = vmatprep.subr.mxu0 0.0
    %297 = vmatpush1.msra.mxu0 0.0
    %298 = vmatprep.subr.mxu0 0.0
    %299 = vmatpush1.msra.mxu0 0.0
    %300 = vmatprep.subr.mxu0 0.0
    %301 = vmatpush1.msra.mxu0 0.0
    %302 = vmatprep.subr.mxu0 0.0
    %303 = vmatpush1.msra.mxu0 0.0
    %304 = vmatprep.subr.mxu0 0.0
    %305 = vmatpush1.msra.mxu0 0.0
    %306 = vmatprep.subr.mxu0 0.0
    %307 = vmatpush1.msra.mxu0 0.0
    %308 = vmatprep.subr.mxu0 0.0
    %309 = vmatpush1.msra.mxu0 0.0
    %310 = vmatprep.subr.mxu0 0.0
    %311 = vmatpush1.msra.mxu0 0.0
    %312 = vmatprep.subr.mxu0 0.0
    %313 = vmatpush1.msra.mxu0 0.0
    %314 = vmatprep.subr.mxu0 0.0
    %315 = vmatpush1.msra.mxu0 0.0
    %316 = vmatprep.mubr.f32.mxu0 0.0
    %317 = vmatmul.mubr.f32.gmra.mrb[0].mxu0 %v250
    %v318 = vpop.f32.mrb[0].mxu0
    %v319 = vadd.f32 0.0, %v318
    %v320 = vpop.f32.mrb[0].mxu0
    %321 = vdwg.mxu0
    %vm322 = vcmask 7168
    %323 = vst.msk [vmem:[%s8] sm:$0xff] %vm322, %v319
    // Predicated region
    $region54: #{tpu_custom_call.1} parent=1 // pred_check
      _
    $region55: #{tpu_custom_call.1} parent=1 // pred_check_branch
      %325 = sbr.rel (0) target = $region57
    $region56: #{tpu_custom_call.1} parent=1 // pred_region
      _
    $region57: #{tpu_custom_call.1} parent=1 // pred_fallthru
      _
    // Predicated region
    $region58: #{tpu_custom_call.1} parent=1 // pred_check
      _
    $region59: #{tpu_custom_call.1} parent=1 // pred_check_branch
      %327 = sbr.rel (0) target = $region61
    $region60: #{tpu_custom_call.1} parent=1 // pred_region
      _
    $region61: #{tpu_custom_call.1} parent=1 // pred_fallthru
      _
    %328 = vsyncpa [#allocation3], 1
    %329 = vsyncpa [#allocation5], 1
    %330 = vsyncpa [#allocation8], 1

</llo_original>
